<compile_context>
chip_gen: v6e
topology: v6e:2x2x1
jax: 0.10.0
libtpu: 0.0.40
codegen_flags: <defaults>
</compile_context>

<pallas_src>
import functools
import math

import jax
import jax.numpy as jnp
from jax.experimental import pallas as pl
from jax.experimental.pallas import tpu as pltpu


# --------------------------------------------------------------------------- #
# Kernels
# --------------------------------------------------------------------------- #
def _dropout2d_rowgain_kernel(x_ref, g_ref, o_ref):
    # x_ref: (tile_r, tile_l) input tile; g_ref: (tile_r, 1) f32 per-channel
    # gain (0.0 or 1/(1-p)) broadcast over the lane axis.  Multiply in f32,
    # cast only the product back to the output dtype.
    o_ref[...] = (x_ref[...].astype(jnp.float32) * g_ref[...]).astype(o_ref.dtype)


def _dropout2d_grouped_kernel(x_ref, g_ref, o_ref, *, hw, grp):
    # x_ref: (tile_r, grp*hw) -- `grp` whole channels packed along the lane
    # axis (lane-dense even when hw % 128 != 0).
    # g_ref: (tile_r, grp) f32 per-channel gain.
    # Expand each gain value to its `hw` lanes with an iota-built 0/1 expansion
    # matrix and a single MXU matmul (no reshape / gather needed; the MXU is
    # idle in this memory-bound kernel and the VPU work is hidden under DMA).
    lanes = grp * hw
    lane = jax.lax.broadcasted_iota(jnp.int32, (grp, lanes), 1)
    chan = jax.lax.broadcasted_iota(jnp.int32, (grp, lanes), 0)
    lo = chan * hw
    expand = ((lane >= lo) & (lane < lo + hw)).astype(jnp.float32)   # (grp, lanes)
    gain = jnp.dot(g_ref[...], expand, preferred_element_type=jnp.float32)
    o_ref[...] = (x_ref[...].astype(jnp.float32) * gain).astype(o_ref.dtype)


# --------------------------------------------------------------------------- #
# Tiling helpers
# --------------------------------------------------------------------------- #
def _round_up(a, b):
    return ((a + b - 1) // b) * b


def _sublane_multiple(itemsize):
    # Sub-32-bit dtypes pack along sublanes: f32 -> 8, bf16/f16 -> 16, int8 -> 32.
    return max(8, 32 // max(1, itemsize))


def _choose_tiles(nrows, nlanes, itemsize, sub, tile_budget_bytes):
    """Pick (tile_rows, tile_lanes) obeying the (sub, 128) rule and a byte cap."""
    # Lane (column) tile: prefer the full lane extent (lane-dense stores,
    # contiguous HBM stripes); only split into 128-multiples when even a
    # `sub`-row stripe would blow the per-tile budget.
    if nlanes <= 128 or sub * nlanes * itemsize <= tile_budget_bytes:
        tile_l = nlanes
    else:
        tile_l = max(128, (tile_budget_bytes // (sub * itemsize)) // 128 * 128)

    # Row (sublane) tile: multiple of the dtype packing factor, or full extent.
    if nrows <= sub:
        tile_r = nrows
    else:
        max_rows = max(sub, tile_budget_bytes // max(1, tile_l * itemsize))
        tile_r = max(sub, (max_rows // sub) * sub)
        tile_r = min(tile_r, _round_up(nrows, sub))
    return tile_r, tile_l


# --------------------------------------------------------------------------- #
# Public wrapper
# --------------------------------------------------------------------------- #
def dropout2d(x, drop_ratio, seed=0, donate_input=False):
    """Forward of the PyTorch `Dropout2d` module (training-mode semantics).

    Whole (n, c) channels are zeroed with probability `drop_ratio`; kept
    channels are scaled by 1/(1 - drop_ratio).
    """
    if drop_ratio < 0.0 or drop_ratio > 1.0:
        raise ValueError("drop_ratio must lie in [0.0, 1.0]")
    if drop_ratio == 0.0:
        return x                                   # module returns inputs unchanged

    squeeze = False
    if x.ndim == 3:                                # (C, H, W): unbatched input
        x = x[None]
        squeeze = True
    if x.ndim != 4:
        raise ValueError("expected (N, C, H, W) or (C, H, W) input")

    if drop_ratio >= 1.0:                          # every channel dropped
        out = jnp.zeros_like(x)
        return out[0] if squeeze else out

    n, c, h, w = x.shape
    nc, hw = n * c, h * w
    itemsize = jnp.dtype(x.dtype).itemsize
    sub = _sublane_multiple(itemsize)

    # Per-(n, c) keep/scale gains, generated once wrapper-side in f32 so kept
    # channels are scaled by the exact 1/(1-p).
    scale = 1.0 / (1.0 - drop_ratio)
    key = jax.random.PRNGKey(seed)
    keep = jax.random.uniform(key, (nc,), dtype=jnp.float32) >= jnp.float32(drop_ratio)
    gain = keep.astype(jnp.float32) * jnp.float32(scale)                # (nc,)

    # Layout choice.  When H*W is not a multiple of 128, pack G whole channels
    # per row so the lane axis is dense (unmasked vst stores).  Fall back to
    # the simple (nc, hw) view when the grouping does not apply (the fallback
    # only matters for large H*W where the lane-padding loss is already small).
    grp = 128 // math.gcd(hw, 128)
    grouped = (hw % 128 != 0 and nc % grp == 0 and nc >= grp and grp * hw <= 8192)

    if grouped:
        nrows, nlanes = nc // grp, grp * hw
        x2 = x.reshape(nrows, nlanes)              # free row-major reshape
        gain2 = gain.reshape(nrows, grp)
        # Smaller budget: the in-kernel gain expansion materialises tile-sized
        # f32 temporaries (expansion matrix + expanded gain) in VMEM.
        budget = 2 * 1024 * 1024
        kernel = functools.partial(_dropout2d_grouped_kernel, hw=hw, grp=grp)
        gain_lanes = grp
    else:
        nrows, nlanes = nc, hw
        x2 = x.reshape(nrows, nlanes)
        gain2 = gain.reshape(nrows, 1)
        # ~4 MiB tiles amortise the fixed ~0.35 us per-grid-step cost on
        # v6e/v7x; double-buffered footprint = 4x tile = 16 MiB, covered by the
        # explicit vmem_limit below (v5e default scoped VMEM is only 16 MiB).
        budget = 4 * 1024 * 1024
        kernel = _dropout2d_rowgain_kernel
        gain_lanes = 1

    tile_r, tile_l = _choose_tiles(nrows, nlanes, itemsize, sub, budget)
    if grouped:
        tile_l = nlanes   # grp*hw <= 8192 lanes always fits; keep rows group-aligned

    # Megacore (v7x has 2 TensorCores): give the "parallel" grid at least 2
    # steps for medium/large tensors instead of collapsing to a single tile.
    if (pl.cdiv(nrows, tile_r) * pl.cdiv(nlanes, tile_l) == 1
            and nrows >= 2 * sub
            and nrows * nlanes * itemsize > (1 << 21)):
        tile_r = _round_up(pl.cdiv(nrows, 2), sub)

    # NOTE: keep the lane axis as the LAST (innermost) grid axis — the gain
    # block index is then unchanged across consecutive steps (DMA elided) and
    # output rows are written back in contiguous HBM order.
    grid = (pl.cdiv(nrows, tile_r), pl.cdiv(nlanes, tile_l))

    out2 = pl.pallas_call(
        kernel,
        out_shape=jax.ShapeDtypeStruct((nrows, nlanes), x.dtype),
        grid=grid,
        in_specs=[
            pl.BlockSpec((tile_r, tile_l), lambda i, j: (i, j)),         # x tile
            pl.BlockSpec((tile_r, gain_lanes), lambda i, j: (i, 0)),     # gains
        ],
        out_specs=pl.BlockSpec((tile_r, tile_l), lambda i, j: (i, j)),
        compiler_params=pltpu.CompilerParams(
            dimension_semantics=("parallel", "parallel"),
            vmem_limit_bytes=40 * 1024 * 1024),
        cost_estimate=pl.CostEstimate(
            flops=2 * nrows * nlanes,
            transcendentals=0,
            bytes_accessed=2 * nrows * nlanes * itemsize + nrows * gain_lanes * 4),
        input_output_aliases=({0: 0} if donate_input else {}),
    )(x2, gain2)

    out = out2.reshape(n, c, h, w)
    return out[0] if squeeze else out


# --------------------------------------------------------------------------- #
# Smoke tests
# --------------------------------------------------------------------------- #
if __name__ == "__main__":
    def check_channels(x, y, p):
        n_, c_, h_, w_ = x.shape
        s = 1.0 / (1.0 - p)
        xr = jnp.reshape(x, (n_ * c_, h_ * w_)).astype(jnp.float32)
        yr = jnp.reshape(y, (n_ * c_, h_ * w_)).astype(jnp.float32)
        for i in range(n_ * c_):
            dropped = bool(jnp.all(yr[i] == 0.0))
            kept = bool(jnp.allclose(yr[i], xr[i] * s, rtol=1e-2, atol=1e-5))
            assert dropped or kept, f"channel {i}: neither fully dropped nor scaled"

    # 1) Main case: f32, H*W a multiple of 128 (lane-dense fast path).
    x = jax.random.normal(jax.random.PRNGKey(0), (2, 4, 16, 16), dtype=jnp.float32)
    y = jax.block_until_ready(dropout2d(x, drop_ratio=0.5, seed=42))
    check_channels(x, y, 0.5)

    # 2) Grouped lane-dense path: H*W = 49 (not a 128-multiple), 128 channels/row.
    xg = jax.random.normal(jax.random.PRNGKey(1), (8, 128, 7, 7), dtype=jnp.float32)
    yg = jax.block_until_ready(dropout2d(xg, drop_ratio=0.3, seed=3))
    check_channels(xg, yg, 0.3)

    # 3) Ungrouped odd-H*W fallback (N*C not a multiple of the group factor).
    xo = jax.random.normal(jax.random.PRNGKey(2), (2, 4, 7, 7), dtype=jnp.float32)
    yo = jax.block_until_ready(dropout2d(xo, drop_ratio=0.5, seed=5))
    check_channels(xo, yo, 0.5)

    # 4) bf16 input (dtype-aware sublane tiling) + 3-D (C, H, W) API parity.
    xb = jax.random.normal(jax.random.PRNGKey(3), (4, 16, 16), dtype=jnp.bfloat16)
    yb = jax.block_until_ready(dropout2d(xb, drop_ratio=0.5, seed=9))
    check_channels(xb[None], yb[None], 0.5)

    # 5) drop_ratio == 1.0 (module default) -> all zeros; 0.0 -> identity.
    y1 = jax.block_until_ready(dropout2d(x, drop_ratio=1.0, seed=7))
    assert bool(jnp.all(y1 == 0.0))
    y0 = dropout2d(x, drop_ratio=0.0)
    assert bool(jnp.all(y0 == x))

    print("KERNEL_OK")
</pallas_src>

<mosaic_0001>
module attributes {stable_mosaic.version = 11 : i64} {
  func.func @_dropout2d_rowgain_kernel(%arg0: i32, %arg1: i32, %arg2: memref<8x256xf32, #tpu.memory_space<vmem>>, %arg3: memref<8x1xf32, #tpu.memory_space<vmem>>, %arg4: memref<8x256xf32, #tpu.memory_space<vmem>>) attributes {dimension_semantics = [#tpu.dimension_semantics<parallel>, #tpu.dimension_semantics<parallel>], iteration_bounds = array<i64: 1, 1>, scalar_prefetch = 0 : i64, scratch_operands = 0 : i64, tpu.core_type = #tpu.core_type<tc>, window_params = [{transform_indices = @transform_0, window_bounds = array<i64: 8, 256>}, {transform_indices = @transform_1, window_bounds = array<i64: 8, 1>}, {transform_indices = @transform_2, window_bounds = array<i64: 8, 256>}]} {
    %c0 = arith.constant 0 : index
    %c0_0 = arith.constant 0 : index
    %0 = vector.load %arg2[%c0, %c0_0] : memref<8x256xf32, #tpu.memory_space<vmem>>, vector<8x256xf32>
    %c0_1 = arith.constant 0 : index
    %c0_2 = arith.constant 0 : index
    %1 = vector.load %arg3[%c0_1, %c0_2] : memref<8x1xf32, #tpu.memory_space<vmem>>, vector<8x1xf32>
    %2 = vector.broadcast %1 : vector<8x1xf32> to vector<8x256xf32>
    %3 = arith.mulf %0, %2 : vector<8x256xf32>
    %c0_3 = arith.constant 0 : index
    %c0_4 = arith.constant 0 : index
    %4 = vector.load %arg4[%c0_3, %c0_4] : memref<8x256xf32, #tpu.memory_space<vmem>>, vector<8x256xf32>
    tpu.vector_store %arg4[%c0_3, %c0_4], %3 {strides = array<i32>} : memref<8x256xf32, #tpu.memory_space<vmem>>, vector<8x256xf32>,
    return
  }
  func.func @transform_0(%arg0: i32, %arg1: i32) -> (i32, i32) {
    %c0_i32 = arith.constant 0 : i32
    return %arg0, %arg1 : i32, i32
  }
  func.func @transform_1(%arg0: i32, %arg1: i32) -> (i32, i32) {
    %c0_i32 = arith.constant 0 : i32
    %c0_i32_0 = arith.constant 0 : i32
    return %arg0, %c0_i32 : i32, i32
  }
  func.func @transform_2(%arg0: i32, %arg1: i32) -> (i32, i32) {
    %c0_i32 = arith.constant 0 : i32
    return %arg0, %arg1 : i32, i32
  }
}

</mosaic_0001>

<llo_original>
// kernel: tpu_custom_call.1
$region0: #{tpu_custom_call.1}
  #allocation0 [shape = 'u32[]', space=smem, size = 0x4, offset = 0x4, fixed_abs, tag = 'smem constant byte address 0x4 - core index']
  #allocation1 [shape = 'u32[144,128]{1,0:T(1,128)}', space=vmem, size = 0x12000, scoped, tag = 'internal scratch']
  %s0 = inlined_call_operand.hbm [shape: f32[8,256], index: 0, kind: input, shape index: {}]
  %s1 = inlined_call_operand.vmem [shape: f32[8,1], index: 1, kind: input, shape index: {}]
  %s2 = inlined_call_operand.hbm [shape: f32[8,256], index: 2, kind: output, shape index: {}]
  %s3 = sld [smem:[#allocation0]]
  $region22: #{tpu_custom_call.1} parent=0
    _
  %s5 = ssub.s32 1, %s3
  %s6 = scalar_select 0, %s5, %s3
  $region1: #{tpu_custom_call.1} parent=0
    #allocation2 [shape = 'u8[8192]{0}', space=vmem, size = 0x2000, scoped, tag = 'input window, operand 0, single buffered']
    #allocation3 [shape = 's32[1]{0}', space=sflag, size = 0x4, scoped, tag = 'scoped memory for tpu_custom_call.1']
    #allocation4 [shape = 's32[1]{0}', space=sflag, size = 0x4, scoped, tag = 'scoped memory for tpu_custom_call.1']
    #allocation5 [shape = 'u8[8192]{0}', space=vmem, size = 0x2000, scoped, tag = 'output window, operand 0, single buffered']
    %7 = vsyncpa [#allocation3], 0
    %8 = vsyncpa [#allocation4], 0
    // Predicated region
    $region2: #{tpu_custom_call.1} parent=1 // pred_check
      _
    $region3: #{tpu_custom_call.1} parent=1 // pred_check_branch
      %10 = sbr.rel (0) target = $region5
    $region4: #{tpu_custom_call.1} parent=1 // pred_region
      %s12 = ssub.s32 256, 256
      %13 = vsyncadd [#allocation3], %s12
      %s15 = sshll.u32 [#allocation2], 4
      %s16 = int_to_ptr.vmem [resolvable:$true] %s15
      %18 = dma.hbm_to_vmem [thread:$0]  %s0, 256, %s16, [#allocation3]
    $region5: #{tpu_custom_call.1} parent=1 // pred_fallthru
      _
    // Predicated region
    $region6: #{tpu_custom_call.1} parent=1 // pred_check
      _
    $region7: #{tpu_custom_call.1} parent=1 // pred_check_branch
      %20 = sbr.rel (0) target = $region9
    $region8: #{tpu_custom_call.1} parent=1 // pred_region
      _
    $region9: #{tpu_custom_call.1} parent=1 // pred_fallthru
      _
    // Predicated region
    $region10: #{tpu_custom_call.1} parent=1 // pred_check
      _
    $region11: #{tpu_custom_call.1} parent=1 // pred_check_branch
      %22 = sbr.rel (0) target = $region13
    $region12: #{tpu_custom_call.1} parent=1 // pred_region
      %23 = dma.done [#allocation3], 256
    $region13: #{tpu_custom_call.1} parent=1 // pred_fallthru
      _
    %v24 = vld [vmem:[#allocation2] sm:$0xff]
    %v25 = vld [vmem:[#allocation2 + $0x8] sm:$0xff]
    %v26 = vld [vmem:[%s1] sm:$0xff]
    %28 = vset.pattern.permute.xlu0 0
    %29 = vperm.xlu0 %28, %v26
    %v30 = vpop.permute.xlu0 %29
    %v32 = vmul.f32 %v24, %v30
    %v33 = vmul.f32 %v25, %v30
    %34 = vst [vmem:[#allocation5] sm:$0xff] %v32
    %35 = vst [vmem:[#allocation5 + $0x8] sm:$0xff] %v33
    // Predicated region
    $region14: #{tpu_custom_call.1} parent=1 // pred_check
      _
    $region15: #{tpu_custom_call.1} parent=1 // pred_check_branch
      %37 = sbr.rel (0) target = $region17
    $region16: #{tpu_custom_call.1} parent=1 // pred_region
      %s39 = ssub.s32 256, 256
      %40 = vsyncadd [#allocation4], %s39
      %s42 = sshll.u32 [#allocation5], 4
      %s43 = int_to_ptr.vmem [resolvable:$true] %s42
      %45 = dma.vmem_to_hbm [thread:$0]  %s43, 256, %s2, [#allocation4]
    $region17: #{tpu_custom_call.1} parent=1 // pred_fallthru
      _
    // Predicated region
    $region18: #{tpu_custom_call.1} parent=1 // pred_check
      _
    $region19: #{tpu_custom_call.1} parent=1 // pred_check_branch
      %47 = sbr.rel (0) target = $region21
    $region20: #{tpu_custom_call.1} parent=1 // pred_region
      %48 = dma.done [#allocation4], 256
    $region21: #{tpu_custom_call.1} parent=1 // pred_fallthru
      _
    %49 = vsyncpa [#allocation3], 1
    %50 = vsyncpa [#allocation4], 1

</llo_original>
